<compile_context>
chip_gen: v7x
topology: tpu7x:2x2x1
jax: 0.10.0
libtpu: 0.0.40
codegen_flags: <defaults>
</compile_context>

<pallas_src>
import functools
import math

import jax
import jax.numpy as jnp
from jax.experimental import pallas as pl
from jax.experimental.pallas import tpu as pltpu


_BN_EPS = 1e-5


# ---------------------------------------------------------------------------
# Tiling / compiler-parameter helpers.
# ---------------------------------------------------------------------------
def _round_up(v, m):
    return (v + m - 1) // m * m


def _pick_tile(n):
    """Row-tile size (multiple of 8, at most 256) and padded node count."""
    tm = 256
    if n <= tm:
        tm = max(8, _round_up(n, 8))
    n_pad = _round_up(n, tm)
    return tm, n_pad


def _vmem_limit(blocks):
    """Explicit scoped-VMEM budget: 2 buffers per block + headroom, clamped."""
    total = 0
    for shape, dtype in blocks:
        total += 2 * math.prod(shape) * jnp.dtype(dtype).itemsize
    total = int(total * 1.25) + (2 << 20)
    return max(16 << 20, min(total, 60 << 20))   # keep below v7x's 64 MiB VMEM


def _compiler_params(semantics, blocks):
    return pltpu.CompilerParams(
        dimension_semantics=semantics,
        vmem_limit_bytes=_vmem_limit(blocks),
    )


# ---------------------------------------------------------------------------
# Linear (+ optional ReLU): row-tiled, bf16 MXU operands, f32 accumulate.
# ---------------------------------------------------------------------------
def _linear_kernel(x_ref, w_ref, b_ref, o_ref, *, apply_relu):
    y = jnp.dot(x_ref[...], w_ref[...], preferred_element_type=jnp.float32)
    y = y + b_ref[...]
    if apply_relu:
        y = jnp.maximum(y, 0.0)
    o_ref[...] = y.astype(o_ref.dtype)


def linear(x, w, b, *, apply_relu, out_dtype, tm):
    n_pad, din = x.shape
    dout = w.shape[1]
    blocks = [((tm, din), x.dtype), ((din, dout), w.dtype),
              ((1, dout), b.dtype), ((tm, dout), out_dtype)]
    return pl.pallas_call(
        functools.partial(_linear_kernel, apply_relu=apply_relu),
        out_shape=jax.ShapeDtypeStruct((n_pad, dout), out_dtype),
        grid_spec=pltpu.PrefetchScalarGridSpec(
            num_scalar_prefetch=0,
            grid=(n_pad // tm,),
            in_specs=[pl.BlockSpec((tm, din), lambda i: (i, 0)),
                      pl.BlockSpec((din, dout), lambda i: (0, 0)),
                      pl.BlockSpec((1, dout), lambda i: (0, 0))],
            out_specs=pl.BlockSpec((tm, dout), lambda i: (i, 0)),
        ),
        compiler_params=_compiler_params(("parallel",), blocks),
    )(x, w, b)


# ---------------------------------------------------------------------------
# ConvolutionalLayer_1P: adj row-block streamed per tile, full h resident.
# ---------------------------------------------------------------------------
def _conv_body(adj_ref, h_ref, w_ref, b_ref, *, tm):
    i = pl.program_id(0)
    h = h_ref[...]                                              # (Npad, din) bf16
    adj = adj_ref[...]                                          # (tm,  Npad) bf16
    # neighbor aggregation (mean encoded in the row-normalized adjacency)
    agg = jnp.dot(adj, h, preferred_element_type=jnp.float32)   # (tm, din) f32
    start = pl.multiple_of(i * tm, tm)
    x_self = h_ref[pl.ds(start, tm), :]                         # (tm, din) bf16
    # single MXU pass with K = 2*din instead of two K=din matmuls
    feats = jnp.concatenate([x_self, agg.astype(jnp.bfloat16)], axis=-1)
    y = jnp.dot(feats, w_ref[...], preferred_element_type=jnp.float32)
    return y + b_ref[...]                                       # (tm, dout) f32


def _conv1p_kernel(adj_ref, h_ref, w_ref, b_ref, o_ref, *, tm):
    o_ref[...] = _conv_body(adj_ref, h_ref, w_ref, b_ref, tm=tm).astype(o_ref.dtype)


def _conv1p_stats_kernel(adj_ref, h_ref, w_ref, b_ref,
                         o_ref, mean_ref, rstd_ref,
                         sum_ref, sq_ref, *, tm, n_true):
    i = pl.program_id(0)
    y = _conv_body(adj_ref, h_ref, w_ref, b_ref, tm=tm)         # (tm, dout) f32
    o_ref[...] = y.astype(o_ref.dtype)

    @pl.when(i == 0)
    def _():
        sum_ref[...] = jnp.zeros_like(sum_ref)
        sq_ref[...] = jnp.zeros_like(sq_ref)

    # mask padded rows so BatchNorm statistics use the true node count
    rows = jax.lax.broadcasted_iota(jnp.int32, (tm, 1), 0) + i * tm
    mask = (rows < n_true).astype(jnp.float32)
    ym = y * mask
    sum_ref[...] += jnp.sum(ym, axis=0, keepdims=True)
    sq_ref[...] += jnp.sum(ym * y, axis=0, keepdims=True)

    @pl.when(i == pl.num_programs(0) - 1)
    def _():
        inv_n = 1.0 / float(n_true)
        mean = sum_ref[...] * inv_n
        var = sq_ref[...] * inv_n - mean * mean
        mean_ref[...] = mean
        rstd_ref[...] = jax.lax.rsqrt(var + _BN_EPS)


def conv1p(adj, h, w, b, *, out_dtype, tm):
    n_pad, din = h.shape
    dout = w.shape[1]
    blocks = [((tm, n_pad), adj.dtype), ((n_pad, din), h.dtype),
              ((2 * din, dout), w.dtype), ((1, dout), b.dtype),
              ((tm, dout), out_dtype)]
    return pl.pallas_call(
        functools.partial(_conv1p_kernel, tm=tm),
        out_shape=jax.ShapeDtypeStruct((n_pad, dout), out_dtype),
        grid_spec=pltpu.PrefetchScalarGridSpec(
            num_scalar_prefetch=0,
            grid=(n_pad // tm,),
            in_specs=[pl.BlockSpec((tm, n_pad), lambda i: (i, 0)),
                      pl.BlockSpec((n_pad, din), lambda i: (0, 0)),
                      pl.BlockSpec((2 * din, dout), lambda i: (0, 0)),
                      pl.BlockSpec((1, dout), lambda i: (0, 0))],
            out_specs=pl.BlockSpec((tm, dout), lambda i: (i, 0)),
        ),
        compiler_params=_compiler_params(("parallel",), blocks),
    )(adj, h, w, b)


def conv1p_with_bn_stats(adj, h, w, b, *, tm, n_true):
    """conv3 fused with the BatchNorm batch-statistics reduction."""
    n_pad, din = h.shape
    dout = w.shape[1]
    blocks = [((tm, n_pad), adj.dtype), ((n_pad, din), h.dtype),
              ((2 * din, dout), w.dtype), ((1, dout), b.dtype),
              ((tm, dout), jnp.float32), ((1, dout), jnp.float32),
              ((1, dout), jnp.float32)]
    return pl.pallas_call(
        functools.partial(_conv1p_stats_kernel, tm=tm, n_true=n_true),
        out_shape=(jax.ShapeDtypeStruct((n_pad, dout), jnp.float32),
                   jax.ShapeDtypeStruct((1, dout), jnp.float32),    # mean
                   jax.ShapeDtypeStruct((1, dout), jnp.float32)),   # rstd
        grid_spec=pltpu.PrefetchScalarGridSpec(
            num_scalar_prefetch=0,
            grid=(n_pad // tm,),
            in_specs=[pl.BlockSpec((tm, n_pad), lambda i: (i, 0)),
                      pl.BlockSpec((n_pad, din), lambda i: (0, 0)),
                      pl.BlockSpec((2 * din, dout), lambda i: (0, 0)),
                      pl.BlockSpec((1, dout), lambda i: (0, 0))],
            out_specs=(pl.BlockSpec((tm, dout), lambda i: (i, 0)),
                       pl.BlockSpec((1, dout), lambda i: (0, 0)),
                       pl.BlockSpec((1, dout), lambda i: (0, 0))),
            scratch_shapes=[pltpu.VMEM((1, dout), jnp.float32),
                            pltpu.VMEM((1, dout), jnp.float32)],
        ),
        # statistics accumulate across row tiles -> sequential grid axis
        compiler_params=_compiler_params(("arbitrary",), blocks),
    )(adj, h, w, b)


# ---------------------------------------------------------------------------
# Fused tail: BatchNorm normalize -> lin2 (+ReLU) -> lin3.
# ---------------------------------------------------------------------------
def _tail_kernel(h_ref, mean_ref, rstd_ref, g_ref, beta_ref,
                 w2_ref, b2_ref, w3_ref, b3_ref, o_ref):
    h = h_ref[...]                                              # (tm, H) f32
    hn = (h - mean_ref[...]) * rstd_ref[...] * g_ref[...] + beta_ref[...]
    z = jnp.dot(hn.astype(jnp.bfloat16), w2_ref[...],
                preferred_element_type=jnp.float32) + b2_ref[...]
    z = jnp.maximum(z, 0.0)
    #                                             dropout (eval) -> identity
    y = jnp.dot(z.astype(jnp.bfloat16), w3_ref[...],
                preferred_element_type=jnp.float32) + b3_ref[...]
    o_ref[...] = y.astype(o_ref.dtype)


def bn_lin_lin(h, mean, rstd, gamma, beta, w2, b2, w3, b3, *, tm):
    n_pad, hdim = h.shape
    c = w2.shape[1]
    blocks = [((tm, hdim), h.dtype), ((1, hdim), jnp.float32),
              ((1, hdim), jnp.float32), ((1, hdim), jnp.float32),
              ((1, hdim), jnp.float32), ((hdim, c), w2.dtype),
              ((1, c), jnp.float32), ((c, c), w3.dtype), ((1, c), jnp.float32),
              ((tm, c), jnp.float32)]

    def full(shape):
        return pl.BlockSpec(shape, lambda i: (0, 0))

    return pl.pallas_call(
        _tail_kernel,
        out_shape=jax.ShapeDtypeStruct((n_pad, c), jnp.float32),
        grid_spec=pltpu.PrefetchScalarGridSpec(
            num_scalar_prefetch=0,
            grid=(n_pad // tm,),
            in_specs=[pl.BlockSpec((tm, hdim), lambda i: (i, 0)),
                      full((1, hdim)), full((1, hdim)),
                      full((1, hdim)), full((1, hdim)),
                      full((hdim, c)), full((1, c)),
                      full((c, c)), full((1, c))],
            out_specs=pl.BlockSpec((tm, c), lambda i: (i, 0)),
        ),
        compiler_params=_compiler_params(("parallel",), blocks),
    )(h, mean, rstd, gamma, beta, w2, b2, w3, b3)


# ---------------------------------------------------------------------------
# Glue (plain JAX): adjacency construction, parameter init, forward pass.
# ---------------------------------------------------------------------------
def build_adjacency(edge_index, num_nodes, n_pad, reduction_type="mean"):
    # TODO(synk): replace the dense adjacency with CSR offsets in SMEM (scalar
    #             prefetch) + row gather for real CiteSeer-scale graphs; dense
    #             bf16 adjacency is kept here so aggregation stays one SpMM.
    del num_nodes
    src, dst = edge_index[0], edge_index[1]
    adj = jnp.zeros((n_pad, n_pad), jnp.float32).at[dst, src].add(1.0)
    if reduction_type == "mean":
        deg = jnp.clip(jnp.sum(adj, axis=1, keepdims=True), 1.0, None)
        adj = adj / deg
    return adj.astype(jnp.bfloat16)


def init_params(key, num_features, embedding_dim, hidden_channels, num_classes):
    ks = jax.random.split(key, 8)

    def dense(k, din, dout, scale=None):
        scale = scale if scale is not None else (1.0 / jnp.sqrt(din))
        return (jax.random.normal(k, (din, dout), jnp.float32) * scale,
                jnp.zeros((1, dout), jnp.float32))

    p = {}
    p["lin1_w"], p["lin1_b"] = dense(ks[0], num_features, embedding_dim)
    p["conv1_w"], p["conv1_b"] = dense(ks[1], 2 * embedding_dim, hidden_channels)
    p["conv2_w"], p["conv2_b"] = dense(ks[2], 2 * hidden_channels, hidden_channels)
    p["conv3_w"], p["conv3_b"] = dense(ks[3], 2 * hidden_channels, hidden_channels)
    p["bn_gamma"] = jnp.ones((1, hidden_channels), jnp.float32)
    p["bn_beta"] = jnp.zeros((1, hidden_channels), jnp.float32)
    p["lin2_w"], p["lin2_b"] = dense(ks[4], hidden_channels, num_classes)
    p["lin3_w"], p["lin3_b"] = dense(ks[5], num_classes, num_classes)
    return p


def p1gcn2_forward(params, x, edge_index, reduction_type="mean"):
    n = x.shape[0]
    tm, n_pad = _pick_tile(n)

    bf = lambda a: a.astype(jnp.bfloat16)
    x_pad = jnp.pad(x, ((0, n_pad - n), (0, 0))).astype(jnp.bfloat16)
    adj = build_adjacency(edge_index, n, n_pad, reduction_type)

    h = x_pad                                   # ptens.linmaps1 -> identity (singleton domains)
    h = linear(h, bf(params["lin1_w"]), params["lin1_b"],
               apply_relu=True, out_dtype=jnp.bfloat16, tm=tm)
    #                                             dropout (eval) -> identity
    h = conv1p(adj, h, bf(params["conv1_w"]), params["conv1_b"],
               out_dtype=jnp.bfloat16, tm=tm)
    h = conv1p(adj, h, bf(params["conv2_w"]), params["conv2_b"],
               out_dtype=jnp.bfloat16, tm=tm)
    h3, mean, rstd = conv1p_with_bn_stats(
        adj, h, bf(params["conv3_w"]), params["conv3_b"], tm=tm, n_true=n)
    out = bn_lin_lin(h3, mean, rstd,
                     params["bn_gamma"], params["bn_beta"],
                     bf(params["lin2_w"]), params["lin2_b"],
                     bf(params["lin3_w"]), params["lin3_b"], tm=tm)
    return out[:n]                              # ptens.linmaps0 -> identity (singleton domains)


if __name__ == "__main__":
    # Small synthetic "CiteSeer-like" graph.
    NUM_NODES = 128
    NUM_FEATURES = 64
    EMBEDDING_DIM = 32
    HIDDEN_CHANNELS = 32
    NUM_CLASSES = 8
    NUM_EDGES = 512

    key = jax.random.PRNGKey(0)
    k_x, k_src, k_dst, k_params = jax.random.split(key, 4)

    x = jax.random.normal(k_x, (NUM_NODES, NUM_FEATURES), jnp.float32)
    edge_index = jnp.stack([
        jax.random.randint(k_src, (NUM_EDGES,), 0, NUM_NODES),
        jax.random.randint(k_dst, (NUM_EDGES,), 0, NUM_NODES),
    ]).astype(jnp.int32)

    params = init_params(k_params, NUM_FEATURES, EMBEDDING_DIM,
                         HIDDEN_CHANNELS, NUM_CLASSES)

    out = p1gcn2_forward(params, x, edge_index, reduction_type="mean")
    out = jax.block_until_ready(out)

    assert out.shape == (NUM_NODES, NUM_CLASSES), out.shape
    assert jnp.all(jnp.isfinite(out)), "non-finite output"
    print("KERNEL_OK")
</pallas_src>

<mosaic_0001>
module attributes {stable_mosaic.version = 11 : i64} {
  func.func @_linear_kernel(%arg0: i32, %arg1: memref<128x64xbf16, #tpu.memory_space<vmem>>, %arg2: memref<64x32xbf16, #tpu.memory_space<vmem>>, %arg3: memref<1x32xf32, #tpu.memory_space<vmem>>, %arg4: memref<128x32xbf16, #tpu.memory_space<vmem>>) attributes {dimension_semantics = [#tpu.dimension_semantics<parallel>], iteration_bounds = array<i64: 1>, scalar_prefetch = 0 : i64, scratch_operands = 0 : i64, tpu.core_type = #tpu.core_type<tc>, window_params = [{transform_indices = @transform_0, window_bounds = array<i64: 128, 64>}, {pipeline_mode = #tpu.pipeline_mode<synchronous>, transform_indices = @transform_1, window_bounds = array<i64: 64, 32>}, {pipeline_mode = #tpu.pipeline_mode<synchronous>, transform_indices = @transform_2, window_bounds = array<i64: 1, 32>}, {transform_indices = @transform_3, window_bounds = array<i64: 128, 32>}]} {
    %c0 = arith.constant 0 : index
    %c0_0 = arith.constant 0 : index
    %0 = vector.load %arg1[%c0, %c0_0] : memref<128x64xbf16, #tpu.memory_space<vmem>>, vector<128x64xbf16>
    %c0_1 = arith.constant 0 : index
    %c0_2 = arith.constant 0 : index
    %1 = vector.load %arg2[%c0_1, %c0_2] : memref<64x32xbf16, #tpu.memory_space<vmem>>, vector<64x32xbf16>
    %cst = arith.constant dense<0.000000e+00> : vector<128x32xf32>
    %2 = tpu.matmul %0, %1, %cst {dimension_numbers = #tpu.dot_dimension_numbers<[1], [0], [0], [1], [0, 0, 1, 1], [], []>} : vector<128x64xbf16>, vector<64x32xbf16>, vector<128x32xf32> -> vector<128x32xf32>
    %c0_3 = arith.constant 0 : index
    %c0_4 = arith.constant 0 : index
    %3 = vector.load %arg3[%c0_3, %c0_4] : memref<1x32xf32, #tpu.memory_space<vmem>>, vector<1x32xf32>
    %4 = vector.broadcast %3 : vector<1x32xf32> to vector<128x32xf32>
    %5 = arith.addf %2, %4 : vector<128x32xf32>
    %cst_5 = arith.constant 0.000000e+00 : f32
    %6 = vector.broadcast %cst_5 : f32 to vector<128x32xf32>
    %7 = arith.maximumf %5, %6 : vector<128x32xf32>
    %8 = arith.truncf %7 : vector<128x32xf32> to vector<128x32xbf16>
    %c0_6 = arith.constant 0 : index
    %c0_7 = arith.constant 0 : index
    %9 = vector.load %arg4[%c0_6, %c0_7] : memref<128x32xbf16, #tpu.memory_space<vmem>>, vector<128x32xbf16>
    tpu.vector_store %arg4[%c0_6, %c0_7], %8 {strides = array<i32>} : memref<128x32xbf16, #tpu.memory_space<vmem>>, vector<128x32xbf16>,
    return
  }
  func.func @transform_0(%arg0: i32) -> (i32, i32) {
    %c0_i32 = arith.constant 0 : i32
    %c0_i32_0 = arith.constant 0 : i32
    return %arg0, %c0_i32 : i32, i32
  }
  func.func @transform_1(%arg0: i32) -> (i32, i32) {
    %c0_i32 = arith.constant 0 : i32
    %c0_i32_0 = arith.constant 0 : i32
    %c0_i32_1 = arith.constant 0 : i32
    return %c0_i32, %c0_i32_0 : i32, i32
  }
  func.func @transform_2(%arg0: i32) -> (i32, i32) {
    %c0_i32 = arith.constant 0 : i32
    %c0_i32_0 = arith.constant 0 : i32
    %c0_i32_1 = arith.constant 0 : i32
    return %c0_i32, %c0_i32_0 : i32, i32
  }
  func.func @transform_3(%arg0: i32) -> (i32, i32) {
    %c0_i32 = arith.constant 0 : i32
    %c0_i32_0 = arith.constant 0 : i32
    return %arg0, %c0_i32 : i32, i32
  }
}

</mosaic_0001>

<llo_original>
// kernel: tpu_custom_call.1
$region0: #{tpu_custom_call.1}
  #allocation0 [shape = 'u32[]', space=smem, size = 0x4, offset = 0x4, fixed_abs, tag = 'smem constant byte address 0x4 - core index']
  #allocation1 [shape = 'u32[144,128]{1,0:T(1,128)}', space=vmem, size = 0x12000, scoped, tag = 'internal scratch']
  %s0 = inlined_call_operand.vmem [shape: bf16[128,64], index: 0, kind: input, shape index: {}]
  %s1 = inlined_call_operand.vmem [shape: bf16[64,32], index: 1, kind: input, shape index: {}]
  %s2 = inlined_call_operand.vmem [shape: f32[1,32], index: 2, kind: input, shape index: {}]
  %s3 = inlined_call_operand.vmem [shape: bf16[128,32], index: 3, kind: output, shape index: {}]
  %s4 = sld [smem:[#allocation0]]
  $region22: #{tpu_custom_call.1} parent=0
    _
  %s6 = ssub.s32 1, %s4
  %s7 = scalar_select 0, %s6, %s4
  // Predicated region
  $region2: #{tpu_custom_call.1} parent=0 // pred_check
    _
  $region3: #{tpu_custom_call.1} parent=0 // pred_check_branch
    %9 = sbr.rel (0) target = $region5
  $region4: #{tpu_custom_call.1} parent=0 // pred_region
    _
  $region5: #{tpu_custom_call.1} parent=0 // pred_fallthru
    _
  // Predicated region
  $region6: #{tpu_custom_call.1} parent=0 // pred_check
    _
  $region7: #{tpu_custom_call.1} parent=0 // pred_check_branch
    %11 = sbr.rel (0) target = $region9
  $region8: #{tpu_custom_call.1} parent=0 // pred_region
    _
  $region9: #{tpu_custom_call.1} parent=0 // pred_fallthru
    _
  // Predicated region
  $region10: #{tpu_custom_call.1} parent=0 // pred_check
    _
  $region11: #{tpu_custom_call.1} parent=0 // pred_check_branch
    %13 = sbr.rel (0) target = $region13
  $region12: #{tpu_custom_call.1} parent=0 // pred_region
    _
  $region13: #{tpu_custom_call.1} parent=0 // pred_fallthru
    _
  %v15 = vld [vmem:[%s0] sm:$0xf]
  %v16 = vld [vmem:[%s0 + $0x4] sm:$0xf]
  %v17 = vld [vmem:[%s0 + $0x8] sm:$0xf]
  %v18 = vld [vmem:[%s0 + $0xc] sm:$0xf]
  %v19 = vld [vmem:[%s0 + $0x10] sm:$0xf]
  %v20 = vld [vmem:[%s0 + $0x14] sm:$0xf]
  %v21 = vld [vmem:[%s0 + $0x18] sm:$0xf]
  %v22 = vld [vmem:[%s0 + $0x1c] sm:$0xf]
  %v23 = vld [vmem:[%s0 + $0x20] sm:$0xf]
  %v24 = vld [vmem:[%s0 + $0x24] sm:$0xf]
  %v25 = vld [vmem:[%s0 + $0x28] sm:$0xf]
  %v26 = vld [vmem:[%s0 + $0x2c] sm:$0xf]
  %v27 = vld [vmem:[%s0 + $0x30] sm:$0xf]
  %v28 = vld [vmem:[%s0 + $0x34] sm:$0xf]
  %v29 = vld [vmem:[%s0 + $0x38] sm:$0xf]
  %v30 = vld [vmem:[%s0 + $0x3c] sm:$0xf]
  %v31 = vld [vmem:[%s1] sm:$0xf]
  %v32 = vld [vmem:[%s1 + $0x4] sm:$0xf]
  %v33 = vld [vmem:[%s1 + $0x8] sm:$0xf]
  %v34 = vld [vmem:[%s1 + $0xc] sm:$0xf]
  %v35 = vld [vmem:[%s1 + $0x10] sm:$0xf]
  %v36 = vld [vmem:[%s1 + $0x14] sm:$0xf]
  %v37 = vld [vmem:[%s1 + $0x18] sm:$0xf]
  %v38 = vld [vmem:[%s1 + $0x1c] sm:$0xf]
  %v39 = vld [vmem:[%s2] sm:$0x1]
  %v41 = vlaneseq
  %v42 = vshrl.u32 %v41, 7
  %v43 = vsub.s32 0, %v42
  %v44 = vrot.slane %v39, %v43
  %v62 = vunpack.c.l.b16 %v15
  %v63 = vunpack.c.l.b16 %v16
  %v64 = vunpack.c.l.b16 %v17
  %v65 = vunpack.c.l.b16 %v18
  %v66 = vunpack.c.l.b16 %v19
  %v67 = vunpack.c.l.b16 %v20
  %v68 = vunpack.c.l.b16 %v21
  %v69 = vunpack.c.l.b16 %v22
  %v70 = vunpack.c.l.b16 %v23
  %v71 = vunpack.c.l.b16 %v24
  %v72 = vunpack.c.l.b16 %v25
  %v73 = vunpack.c.l.b16 %v26
  %v74 = vunpack.c.l.b16 %v27
  %v75 = vunpack.c.l.b16 %v28
  %v76 = vunpack.c.l.b16 %v29
  %v77 = vunpack.c.l.b16 %v30
  %v78 = vpack.c.b16 %v63, %v62
  %v79 = vpack.c.b16 %v65, %v64
  %v80 = vpack.c.b16 %v67, %v66
  %v81 = vpack.c.b16 %v69, %v68
  %v82 = vpack.c.b16 %v71, %v70
  %v83 = vpack.c.b16 %v73, %v72
  %v84 = vpack.c.b16 %v75, %v74
  %v85 = vpack.c.b16 %v77, %v76
  %v94 = vunpack.c.l.b16 %v31
  %v95 = vunpack.c.l.b16 %v32
  %v96 = vunpack.c.l.b16 %v33
  %v97 = vunpack.c.l.b16 %v34
  %v98 = vunpack.c.l.b16 %v35
  %v99 = vunpack.c.l.b16 %v36
  %v100 = vunpack.c.l.b16 %v37
  %v101 = vunpack.c.l.b16 %v38
  %v102 = vpack.c.b16 %v95, %v94
  %v103 = vpack.c.b16 %v97, %v96
  %v104 = vpack.c.b16 %v99, %v98
  %v105 = vpack.c.b16 %v101, %v100
  %vm110 = vcmask 523264
  %v112 = vsel %vm110, %v78, 0
  %v115 = vsel %vm110, %v79, 0
  %v118 = vsel %vm110, %v80, 0
  %v121 = vsel %vm110, %v81, 0
  %v124 = vsel %vm110, %v82, 0
  %v127 = vsel %vm110, %v83, 0
  %v130 = vsel %vm110, %v84, 0
  %v133 = vsel %vm110, %v85, 0
  %135 = vmatprep.subr.bf16.mxu0 0
  %136 = vmatpush1.bf16.msra.mxu0 %v102
  %137 = vmatprep.subr.bf16.mxu0 0
  %138 = vmatpush1.bf16.msra.mxu0 %v103
  %139 = vmatprep.subr.bf16.mxu0 0
  %140 = vmatpush1.bf16.msra.mxu0 %v104
  %141 = vmatprep.subr.bf16.mxu0 0
  %142 = vmatpush1.bf16.msra.mxu0 %v105
  %143 = vmatprep.subr.bf16.mxu0 0
  %144 = vmatpush1.bf16.msra.mxu0 0
  %145 = vmatprep.subr.bf16.mxu0 0
  %146 = vmatpush1.bf16.msra.mxu0 0
  %147 = vmatprep.subr.bf16.mxu0 0
  %148 = vmatpush1.bf16.msra.mxu0 0
  %149 = vmatprep.subr.bf16.mxu0 0
  %150 = vmatpush1.bf16.msra.mxu0 0
  %151 = vmatprep.subr.bf16.mxu0 0
  %152 = vmatpush1.bf16.msra.mxu0 0
  %153 = vmatprep.subr.bf16.mxu0 0
  %154 = vmatpush1.bf16.msra.mxu0 0
  %155 = vmatprep.subr.bf16.mxu0 0
  %156 = vmatpush1.bf16.msra.mxu0 0
  %157 = vmatprep.subr.bf16.mxu0 0
  %158 = vmatpush1.bf16.msra.mxu0 0
  %159 = vmatprep.subr.bf16.mxu0 0
  %160 = vmatpush1.bf16.msra.mxu0 0
  %161 = vmatprep.subr.bf16.mxu0 0
  %162 = vmatpush1.bf16.msra.mxu0 0
  %163 = vmatprep.subr.bf16.mxu0 0
  %164 = vmatpush1.bf16.msra.mxu0 0
  %165 = vmatprep.subr.bf16.mxu0 0
  %166 = vmatpush1.bf16.msra.mxu0 0
  %167 = vmatprep.mubr.bf16.mxu0 0
  %168 = vmatmul.mubr.bf16.gmra.mrb[0].mxu0 %v112
  %v169 = vpop.f32.mrb[0].mxu0
  %v170 = vadd.f32 %v44, %v169
  %v171 = vpop.f32.mrb[0].mxu0
  %v172 = vpop.f32.mrb[0].mxu0
  %v173 = vadd.f32 %v44, %v172
  %v174 = vpop.f32.mrb[0].mxu0
  %175 = vmatprep.mubr.bf16.mxu0 0
  %176 = vmatmul.mubr.bf16.gmra.mrb[0].mxu0 %v115
  %v177 = vpop.f32.mrb[0].mxu0
  %v178 = vadd.f32 %v44, %v177
  %v179 = vpop.f32.mrb[0].mxu0
  %v180 = vpop.f32.mrb[0].mxu0
  %v181 = vadd.f32 %v44, %v180
  %v182 = vpop.f32.mrb[0].mxu0
  %183 = vmatprep.mubr.bf16.mxu0 0
  %184 = vmatmul.mubr.bf16.gmra.mrb[0].mxu0 %v118
  %v185 = vpop.f32.mrb[0].mxu0
  %v186 = vadd.f32 %v44, %v185
  %v187 = vpop.f32.mrb[0].mxu0
  %v188 = vpop.f32.mrb[0].mxu0
  %v189 = vadd.f32 %v44, %v188
  %v190 = vpop.f32.mrb[0].mxu0
  %191 = vmatprep.mubr.bf16.mxu0 0
  %192 = vmatmul.mubr.bf16.gmra.mrb[0].mxu0 %v121
  %v193 = vpop.f32.mrb[0].mxu0
  %v194 = vadd.f32 %v44, %v193
  %v195 = vpop.f32.mrb[0].mxu0
  %v196 = vpop.f32.mrb[0].mxu0
  %v197 = vadd.f32 %v44, %v196
  %v198 = vpop.f32.mrb[0].mxu0
  %199 = vmatprep.mubr.bf16.mxu0 0
  %200 = vmatmul.mubr.bf16.gmra.mrb[0].mxu0 %v124
  %v201 = vpop.f32.mrb[0].mxu0
  %v202 = vadd.f32 %v44, %v201
  %v203 = vpop.f32.mrb[0].mxu0
  %v204 = vpop.f32.mrb[0].mxu0
  %v205 = vadd.f32 %v44, %v204
  %v206 = vpop.f32.mrb[0].mxu0
  %207 = vmatprep.mubr.bf16.mxu0 0
  %208 = vmatmul.mubr.bf16.gmra.mrb[0].mxu0 %v127
  %v209 = vpop.f32.mrb[0].mxu0
  %v210 = vadd.f32 %v44, %v209
  %v211 = vpop.f32.mrb[0].mxu0
  %v212 = vpop.f32.mrb[0].mxu0
  %v213 = vadd.f32 %v44, %v212
  %v214 = vpop.f32.mrb[0].mxu0
  %215 = vmatprep.mubr.bf16.mxu0 0
  %216 = vmatmul.mubr.bf16.gmra.mrb[0].mxu0 %v130
  %v217 = vpop.f32.mrb[0].mxu0
  %v218 = vadd.f32 %v44, %v217
  %v219 = vpop.f32.mrb[0].mxu0
  %v220 = vpop.f32.mrb[0].mxu0
  %v221 = vadd.f32 %v44, %v220
  %v222 = vpop.f32.mrb[0].mxu0
  %223 = vmatprep.mubr.bf16.mxu0 0
  %224 = vmatmul.mubr.bf16.gmra.mrb[0].mxu0 %v133
  %v225 = vpop.f32.mrb[0].mxu0
  %v226 = vadd.f32 %v44, %v225
  %v227 = vpop.f32.mrb[0].mxu0
  %v228 = vpop.f32.mrb[0].mxu0
  %v229 = vadd.f32 %v44, %v228
  %v230 = vpop.f32.mrb[0].mxu0
  %231 = vdwg.mxu0
  %v232 = vmax.f32 %v170, 0.0
  %v233 = vmax.f32 %v173, 0.0
  %v234 = vmax.f32 %v178, 0.0
  %v235 = vmax.f32 %v181, 0.0
  %v236 = vmax.f32 %v186, 0.0
  %v237 = vmax.f32 %v189, 0.0
  %v238 = vmax.f32 %v194, 0.0
  %v239 = vmax.f32 %v197, 0.0
  %v240 = vmax.f32 %v202, 0.0
  %v241 = vmax.f32 %v205, 0.0
  %v242 = vmax.f32 %v210, 0.0
  %v243 = vmax.f32 %v213, 0.0
  %v244 = vmax.f32 %v218, 0.0
  %v245 = vmax.f32 %v221, 0.0
  %v246 = vmax.f32 %v226, 0.0
  %v247 = vmax.f32 %v229, 0.0
  %v248 = vpack.c.bf16 %v233, %v232
  %v249 = vpack.c.bf16 %v235, %v234
  %v250 = vpack.c.bf16 %v237, %v236
  %v251 = vpack.c.bf16 %v239, %v238
  %v252 = vpack.c.bf16 %v241, %v240
  %v253 = vpack.c.bf16 %v243, %v242
  %v254 = vpack.c.bf16 %v245, %v244
  %v255 = vpack.c.bf16 %v247, %v246
  %v264 = vunpack.c.l.b16 %v248
  %v265 = vunpack.c.h.b16 %v248
  %v266 = vunpack.c.l.b16 %v249
  %v267 = vunpack.c.h.b16 %v249
  %v268 = vunpack.c.l.b16 %v250
  %v269 = vunpack.c.h.b16 %v250
  %v270 = vunpack.c.l.b16 %v251
  %v271 = vunpack.c.h.b16 %v251
  %v272 = vunpack.c.l.b16 %v252
  %v273 = vunpack.c.h.b16 %v252
  %v274 = vunpack.c.l.b16 %v253
  %v275 = vunpack.c.h.b16 %v253
  %v276 = vunpack.c.l.b16 %v254
  %v277 = vunpack.c.h.b16 %v254
  %v278 = vunpack.c.l.b16 %v255
  %v279 = vunpack.c.h.b16 %v255
  %v280 = vpack.c.b16 %v264, %v264
  %v281 = vpack.c.b16 %v265, %v265
  %v282 = vpack.c.b16 %v266, %v266
  %v283 = vpack.c.b16 %v267, %v267
  %v284 = vpack.c.b16 %v268, %v268
  %v285 = vpack.c.b16 %v269, %v269
  %v286 = vpack.c.b16 %v270, %v270
  %v287 = vpack.c.b16 %v271, %v271
  %v288 = vpack.c.b16 %v272, %v272
  %v289 = vpack.c.b16 %v273, %v273
  %v290 = vpack.c.b16 %v274, %v274
  %v291 = vpack.c.b16 %v275, %v275
  %v292 = vpack.c.b16 %v276, %v276
  %v293 = vpack.c.b16 %v277, %v277
  %v294 = vpack.c.b16 %v278, %v278
  %v295 = vpack.c.b16 %v279, %v279
  %vm312 = vcmask 257024
  %313 = vst.msk [vmem:[%s3] sm:$0xf] %vm312, %v280
  %314 = vst.msk [vmem:[%s3 + $0x4] sm:$0xf] %vm312, %v281
  %315 = vst.msk [vmem:[%s3 + $0x8] sm:$0xf] %vm312, %v282
  %316 = vst.msk [vmem:[%s3 + $0xc] sm:$0xf] %vm312, %v283
  %317 = vst.msk [vmem:[%s3 + $0x10] sm:$0xf] %vm312, %v284
  %318 = vst.msk [vmem:[%s3 + $0x14] sm:$0xf] %vm312, %v285
  %319 = vst.msk [vmem:[%s3 + $0x18] sm:$0xf] %vm312, %v286
  %320 = vst.msk [vmem:[%s3 + $0x1c] sm:$0xf] %vm312, %v287
  %321 = vst.msk [vmem:[%s3 + $0x20] sm:$0xf] %vm312, %v288
  %322 = vst.msk [vmem:[%s3 + $0x24] sm:$0xf] %vm312, %v289
  %323 = vst.msk [vmem:[%s3 + $0x28] sm:$0xf] %vm312, %v290
  %324 = vst.msk [vmem:[%s3 + $0x2c] sm:$0xf] %vm312, %v291
  %325 = vst.msk [vmem:[%s3 + $0x30] sm:$0xf] %vm312, %v292
  %326 = vst.msk [vmem:[%s3 + $0x34] sm:$0xf] %vm312, %v293
  %327 = vst.msk [vmem:[%s3 + $0x38] sm:$0xf] %vm312, %v294
  %328 = vst.msk [vmem:[%s3 + $0x3c] sm:$0xf] %vm312, %v295
  // Predicated region
  $region14: #{tpu_custom_call.1} parent=0 // pred_check
    _
  $region15: #{tpu_custom_call.1} parent=0 // pred_check_branch
    %330 = sbr.rel (0) target = $region17
  $region16: #{tpu_custom_call.1} parent=0 // pred_region
    _
  $region17: #{tpu_custom_call.1} parent=0 // pred_fallthru
    _
  // Predicated region
  $region18: #{tpu_custom_call.1} parent=0 // pred_check
    _
  $region19: #{tpu_custom_call.1} parent=0 // pred_check_branch
    %332 = sbr.rel (0) target = $region21
  $region20: #{tpu_custom_call.1} parent=0 // pred_region
    _
  $region21: #{tpu_custom_call.1} parent=0 // pred_fallthru
    _

</llo_original>
